<compile_context>
chip_gen: v7x
topology: tpu7x:2x2x1
jax: 0.10.0
libtpu: 0.0.40
codegen_flags: <defaults>
</compile_context>

<pallas_src>
import jax
import jax.numpy as jnp
from jax.experimental import pallas as pl
from jax.experimental.pallas import tpu as pltpu


def _mlp_kernel(w1_ref, b1_ref, w2_ref, b2_ref, w3_ref, b3_ref, x_ref, o_ref):
    # x block: [6, TB]  (features on sublanes, batch on lanes)
    x = x_ref[...].astype(jnp.float32)
    xs = [x[k:k + 1, :] for k in range(6)]           # 6 x [1, TB]

    # Layer 1: 6 -> 4, sigmoid.  Unrolled VPU FMAs with SMEM scalar weights.
    h1 = []
    for j in range(4):
        acc = xs[0] * w1_ref[j, 0]
        for k in range(1, 6):
            acc = acc + xs[k] * w1_ref[j, k]
        h1.append(jax.nn.sigmoid(acc + b1_ref[j]))   # [1, TB]

    # Layer 2: 4 -> 2, sigmoid.
    h2 = []
    for j in range(2):
        acc = h1[0] * w2_ref[j, 0]
        for k in range(1, 4):
            acc = acc + h1[k] * w2_ref[j, k]
        h2.append(jax.nn.sigmoid(acc + b2_ref[j]))   # [1, TB]

    # Layer 3: 2 -> 1, no activation.
    out = h2[0] * w3_ref[0, 0] + h2[1] * w3_ref[0, 1] + b3_ref[0]
    o_ref[...] = out.astype(o_ref.dtype)             # [1, TB]


def _round_up(n, m):
    return ((n + m - 1) // m) * m


def action_conditioned_ff(x, params, block_batch=65536):
    """x: [B, 6] (any float dtype). params: PyTorch-layout weights W=[out,in], b=[out]."""
    w1, b1 = params["w1"], params["b1"]   # [4,6], [4]
    w2, b2 = params["w2"], params["b2"]   # [2,4], [2]
    w3, b3 = params["w3"], params["b3"]   # [1,2], [1]

    B = x.shape[0]
    x = x.astype(jnp.float32)             # mirrors input.float()

    # Batch tile: multiple of 128 lanes, clamped to what the batch needs.
    tb = min(_round_up(block_batch, 128), _round_up(B, 128))
    b_pad = _round_up(B, tb)
    grid = (b_pad // tb,)

    # Glue: lane-dense layout [6, B_pad] (batch on lanes), zero-padded tail.
    x_t = jnp.pad(x.T, ((0, 0), (0, b_pad - B)))

    smem = pl.BlockSpec(memory_space=pltpu.MemorySpace.SMEM)   # resident scalars

    out_t = pl.pallas_call(
        _mlp_kernel,
        out_shape=jax.ShapeDtypeStruct((1, b_pad), jnp.float32),
        grid=grid,
        in_specs=[
            smem, smem,                                   # w1, b1
            smem, smem,                                   # w2, b2
            smem, smem,                                   # w3, b3
            pl.BlockSpec((6, tb), lambda i: (0, i)),      # x block
        ],
        out_specs=pl.BlockSpec((1, tb), lambda i: (0, i)),
        compiler_params=pltpu.CompilerParams(
            dimension_semantics=("parallel",)),
    )(w1.astype(jnp.float32), b1.astype(jnp.float32),
      w2.astype(jnp.float32), b2.astype(jnp.float32),
      w3.astype(jnp.float32), b3.astype(jnp.float32),
      x_t)

    return out_t[0, :B][:, None]          # [B, 1]


def init_params(key):
    """Deterministic init with PyTorch-Linear-style uniform(-1/sqrt(fan_in), 1/sqrt(fan_in))."""
    sizes = [(4, 6), (2, 4), (1, 2)]
    params = {}
    for idx, (out_f, in_f) in enumerate(sizes, start=1):
        key, kw, kb = jax.random.split(key, 3)
        bound = 1.0 / (in_f ** 0.5)
        params[f"w{idx}"] = jax.random.uniform(
            kw, (out_f, in_f), jnp.float32, minval=-bound, maxval=bound)
        params[f"b{idx}"] = jax.random.uniform(
            kb, (out_f,), jnp.float32, minval=-bound, maxval=bound)
    return params


def _reference(x, params):
    """Pure-JAX reference of the PyTorch forward."""
    h = jax.nn.sigmoid(x @ params["w1"].T + params["b1"])
    h = jax.nn.sigmoid(h @ params["w2"].T + params["b2"])
    return h @ params["w3"].T + params["b3"]


if __name__ == "__main__":
    key = jax.random.PRNGKey(0)
    kp, kx = jax.random.split(key)
    params = init_params(kp)

    batch = 2
    x = jax.random.normal(kx, (batch, 6), dtype=jnp.float32)

    out = action_conditioned_ff(x, params)
    out = jax.block_until_ready(out)

    ref = _reference(x, params)
    assert out.shape == (batch, 1), out.shape
    assert jnp.allclose(out, ref, atol=1e-5, rtol=1e-5), (out, ref)
    print("KERNEL_OK")
</pallas_src>

<mosaic_0001>
module attributes {stable_mosaic.version = 11 : i64} {
  func.func @_mlp_kernel(%arg0: i32, %arg1: memref<4x6xf32, #tpu.memory_space<smem>>, %arg2: memref<4xf32, #tpu.memory_space<smem>>, %arg3: memref<2x4xf32, #tpu.memory_space<smem>>, %arg4: memref<2xf32, #tpu.memory_space<smem>>, %arg5: memref<1x2xf32, #tpu.memory_space<smem>>, %arg6: memref<1xf32, #tpu.memory_space<smem>>, %arg7: memref<6x128xf32, #tpu.memory_space<vmem>>, %arg8: memref<1x128xf32, #tpu.memory_space<vmem>>) attributes {dimension_semantics = [#tpu.dimension_semantics<parallel>], iteration_bounds = array<i64: 1>, scalar_prefetch = 0 : i64, scratch_operands = 0 : i64, tpu.core_type = #tpu.core_type<tc>, window_params = [{transform_indices = @transform_0, window_bounds = array<i64: 4, 6>}, {transform_indices = @transform_1, window_bounds = array<i64: 4>}, {transform_indices = @transform_2, window_bounds = array<i64: 2, 4>}, {transform_indices = @transform_3, window_bounds = array<i64: 2>}, {transform_indices = @transform_4, window_bounds = array<i64: 1, 2>}, {transform_indices = @transform_5, window_bounds = array<i64: 1>}, {transform_indices = @transform_6, window_bounds = array<i64: 6, 128>}, {transform_indices = @transform_7, window_bounds = array<i64: 1, 128>}]} {
    %c0 = arith.constant 0 : index
    %c0_0 = arith.constant 0 : index
    %0 = vector.load %arg7[%c0, %c0_0] : memref<6x128xf32, #tpu.memory_space<vmem>>, vector<6x128xf32>
    %1 = vector.extract_strided_slice %0 {offsets = [0, 0], sizes = [1, 128], strides = [1, 1]} : vector<6x128xf32> to vector<1x128xf32>
    %2 = vector.extract_strided_slice %0 {offsets = [1, 0], sizes = [1, 128], strides = [1, 1]} : vector<6x128xf32> to vector<1x128xf32>
    %3 = vector.extract_strided_slice %0 {offsets = [2, 0], sizes = [1, 128], strides = [1, 1]} : vector<6x128xf32> to vector<1x128xf32>
    %4 = vector.extract_strided_slice %0 {offsets = [3, 0], sizes = [1, 128], strides = [1, 1]} : vector<6x128xf32> to vector<1x128xf32>
    %5 = vector.extract_strided_slice %0 {offsets = [4, 0], sizes = [1, 128], strides = [1, 1]} : vector<6x128xf32> to vector<1x128xf32>
    %6 = vector.extract_strided_slice %0 {offsets = [5, 0], sizes = [1, 128], strides = [1, 1]} : vector<6x128xf32> to vector<1x128xf32>
    %c0_1 = arith.constant 0 : index
    %c0_2 = arith.constant 0 : index
    %7 = memref.load %arg1[%c0_1, %c0_2] : memref<4x6xf32, #tpu.memory_space<smem>>
    %8 = vector.broadcast %7 : f32 to vector<1x128xf32>
    %9 = arith.mulf %1, %8 : vector<1x128xf32>
    %c0_3 = arith.constant 0 : index
    %c1 = arith.constant 1 : index
    %10 = memref.load %arg1[%c0_3, %c1] : memref<4x6xf32, #tpu.memory_space<smem>>
    %11 = vector.broadcast %10 : f32 to vector<1x128xf32>
    %12 = arith.mulf %2, %11 : vector<1x128xf32>
    %13 = arith.addf %9, %12 : vector<1x128xf32>
    %c0_4 = arith.constant 0 : index
    %c2 = arith.constant 2 : index
    %14 = memref.load %arg1[%c0_4, %c2] : memref<4x6xf32, #tpu.memory_space<smem>>
    %15 = vector.broadcast %14 : f32 to vector<1x128xf32>
    %16 = arith.mulf %3, %15 : vector<1x128xf32>
    %17 = arith.addf %13, %16 : vector<1x128xf32>
    %c0_5 = arith.constant 0 : index
    %c3 = arith.constant 3 : index
    %18 = memref.load %arg1[%c0_5, %c3] : memref<4x6xf32, #tpu.memory_space<smem>>
    %19 = vector.broadcast %18 : f32 to vector<1x128xf32>
    %20 = arith.mulf %4, %19 : vector<1x128xf32>
    %21 = arith.addf %17, %20 : vector<1x128xf32>
    %c0_6 = arith.constant 0 : index
    %c4 = arith.constant 4 : index
    %22 = memref.load %arg1[%c0_6, %c4] : memref<4x6xf32, #tpu.memory_space<smem>>
    %23 = vector.broadcast %22 : f32 to vector<1x128xf32>
    %24 = arith.mulf %5, %23 : vector<1x128xf32>
    %25 = arith.addf %21, %24 : vector<1x128xf32>
    %c0_7 = arith.constant 0 : index
    %c5 = arith.constant 5 : index
    %26 = memref.load %arg1[%c0_7, %c5] : memref<4x6xf32, #tpu.memory_space<smem>>
    %27 = vector.broadcast %26 : f32 to vector<1x128xf32>
    %28 = arith.mulf %6, %27 : vector<1x128xf32>
    %29 = arith.addf %25, %28 : vector<1x128xf32>
    %c0_8 = arith.constant 0 : index
    %30 = memref.load %arg2[%c0_8] : memref<4xf32, #tpu.memory_space<smem>>
    %31 = vector.broadcast %30 : f32 to vector<1x128xf32>
    %32 = arith.addf %29, %31 : vector<1x128xf32>
    %33 = arith.negf %32 : vector<1x128xf32>
    %34 = math.exp %33 : vector<1x128xf32>
    %cst = arith.constant 1.000000e+00 : f32
    %35 = vector.broadcast %cst : f32 to vector<1x128xf32>
    %36 = arith.addf %35, %34 : vector<1x128xf32>
    %37 = arith.divf %35, %36 : vector<1x128xf32>
    %c1_9 = arith.constant 1 : index
    %c0_10 = arith.constant 0 : index
    %38 = memref.load %arg1[%c1_9, %c0_10] : memref<4x6xf32, #tpu.memory_space<smem>>
    %39 = vector.broadcast %38 : f32 to vector<1x128xf32>
    %40 = arith.mulf %1, %39 : vector<1x128xf32>
    %c1_11 = arith.constant 1 : index
    %c1_12 = arith.constant 1 : index
    %41 = memref.load %arg1[%c1_11, %c1_12] : memref<4x6xf32, #tpu.memory_space<smem>>
    %42 = vector.broadcast %41 : f32 to vector<1x128xf32>
    %43 = arith.mulf %2, %42 : vector<1x128xf32>
    %44 = arith.addf %40, %43 : vector<1x128xf32>
    %c1_13 = arith.constant 1 : index
    %c2_14 = arith.constant 2 : index
    %45 = memref.load %arg1[%c1_13, %c2_14] : memref<4x6xf32, #tpu.memory_space<smem>>
    %46 = vector.broadcast %45 : f32 to vector<1x128xf32>
    %47 = arith.mulf %3, %46 : vector<1x128xf32>
    %48 = arith.addf %44, %47 : vector<1x128xf32>
    %c1_15 = arith.constant 1 : index
    %c3_16 = arith.constant 3 : index
    %49 = memref.load %arg1[%c1_15, %c3_16] : memref<4x6xf32, #tpu.memory_space<smem>>
    %50 = vector.broadcast %49 : f32 to vector<1x128xf32>
    %51 = arith.mulf %4, %50 : vector<1x128xf32>
    %52 = arith.addf %48, %51 : vector<1x128xf32>
    %c1_17 = arith.constant 1 : index
    %c4_18 = arith.constant 4 : index
    %53 = memref.load %arg1[%c1_17, %c4_18] : memref<4x6xf32, #tpu.memory_space<smem>>
    %54 = vector.broadcast %53 : f32 to vector<1x128xf32>
    %55 = arith.mulf %5, %54 : vector<1x128xf32>
    %56 = arith.addf %52, %55 : vector<1x128xf32>
    %c1_19 = arith.constant 1 : index
    %c5_20 = arith.constant 5 : index
    %57 = memref.load %arg1[%c1_19, %c5_20] : memref<4x6xf32, #tpu.memory_space<smem>>
    %58 = vector.broadcast %57 : f32 to vector<1x128xf32>
    %59 = arith.mulf %6, %58 : vector<1x128xf32>
    %60 = arith.addf %56, %59 : vector<1x128xf32>
    %c1_21 = arith.constant 1 : index
    %61 = memref.load %arg2[%c1_21] : memref<4xf32, #tpu.memory_space<smem>>
    %62 = vector.broadcast %61 : f32 to vector<1x128xf32>
    %63 = arith.addf %60, %62 : vector<1x128xf32>
    %64 = arith.negf %63 : vector<1x128xf32>
    %65 = math.exp %64 : vector<1x128xf32>
    %cst_22 = arith.constant 1.000000e+00 : f32
    %66 = vector.broadcast %cst_22 : f32 to vector<1x128xf32>
    %67 = arith.addf %66, %65 : vector<1x128xf32>
    %68 = arith.divf %66, %67 : vector<1x128xf32>
    %c2_23 = arith.constant 2 : index
    %c0_24 = arith.constant 0 : index
    %69 = memref.load %arg1[%c2_23, %c0_24] : memref<4x6xf32, #tpu.memory_space<smem>>
    %70 = vector.broadcast %69 : f32 to vector<1x128xf32>
    %71 = arith.mulf %1, %70 : vector<1x128xf32>
    %c2_25 = arith.constant 2 : index
    %c1_26 = arith.constant 1 : index
    %72 = memref.load %arg1[%c2_25, %c1_26] : memref<4x6xf32, #tpu.memory_space<smem>>
    %73 = vector.broadcast %72 : f32 to vector<1x128xf32>
    %74 = arith.mulf %2, %73 : vector<1x128xf32>
    %75 = arith.addf %71, %74 : vector<1x128xf32>
    %c2_27 = arith.constant 2 : index
    %c2_28 = arith.constant 2 : index
    %76 = memref.load %arg1[%c2_27, %c2_28] : memref<4x6xf32, #tpu.memory_space<smem>>
    %77 = vector.broadcast %76 : f32 to vector<1x128xf32>
    %78 = arith.mulf %3, %77 : vector<1x128xf32>
    %79 = arith.addf %75, %78 : vector<1x128xf32>
    %c2_29 = arith.constant 2 : index
    %c3_30 = arith.constant 3 : index
    %80 = memref.load %arg1[%c2_29, %c3_30] : memref<4x6xf32, #tpu.memory_space<smem>>
    %81 = vector.broadcast %80 : f32 to vector<1x128xf32>
    %82 = arith.mulf %4, %81 : vector<1x128xf32>
    %83 = arith.addf %79, %82 : vector<1x128xf32>
    %c2_31 = arith.constant 2 : index
    %c4_32 = arith.constant 4 : index
    %84 = memref.load %arg1[%c2_31, %c4_32] : memref<4x6xf32, #tpu.memory_space<smem>>
    %85 = vector.broadcast %84 : f32 to vector<1x128xf32>
    %86 = arith.mulf %5, %85 : vector<1x128xf32>
    %87 = arith.addf %83, %86 : vector<1x128xf32>
    %c2_33 = arith.constant 2 : index
    %c5_34 = arith.constant 5 : index
    %88 = memref.load %arg1[%c2_33, %c5_34] : memref<4x6xf32, #tpu.memory_space<smem>>
    %89 = vector.broadcast %88 : f32 to vector<1x128xf32>
    %90 = arith.mulf %6, %89 : vector<1x128xf32>
    %91 = arith.addf %87, %90 : vector<1x128xf32>
    %c2_35 = arith.constant 2 : index
    %92 = memref.load %arg2[%c2_35] : memref<4xf32, #tpu.memory_space<smem>>
    %93 = vector.broadcast %92 : f32 to vector<1x128xf32>
    %94 = arith.addf %91, %93 : vector<1x128xf32>
    %95 = arith.negf %94 : vector<1x128xf32>
    %96 = math.exp %95 : vector<1x128xf32>
    %cst_36 = arith.constant 1.000000e+00 : f32
    %97 = vector.broadcast %cst_36 : f32 to vector<1x128xf32>
    %98 = arith.addf %97, %96 : vector<1x128xf32>
    %99 = arith.divf %97, %98 : vector<1x128xf32>
    %c3_37 = arith.constant 3 : index
    %c0_38 = arith.constant 0 : index
    %100 = memref.load %arg1[%c3_37, %c0_38] : memref<4x6xf32, #tpu.memory_space<smem>>
    %101 = vector.broadcast %100 : f32 to vector<1x128xf32>
    %102 = arith.mulf %1, %101 : vector<1x128xf32>
    %c3_39 = arith.constant 3 : index
    %c1_40 = arith.constant 1 : index
    %103 = memref.load %arg1[%c3_39, %c1_40] : memref<4x6xf32, #tpu.memory_space<smem>>
    %104 = vector.broadcast %103 : f32 to vector<1x128xf32>
    %105 = arith.mulf %2, %104 : vector<1x128xf32>
    %106 = arith.addf %102, %105 : vector<1x128xf32>
    %c3_41 = arith.constant 3 : index
    %c2_42 = arith.constant 2 : index
    %107 = memref.load %arg1[%c3_41, %c2_42] : memref<4x6xf32, #tpu.memory_space<smem>>
    %108 = vector.broadcast %107 : f32 to vector<1x128xf32>
    %109 = arith.mulf %3, %108 : vector<1x128xf32>
    %110 = arith.addf %106, %109 : vector<1x128xf32>
    %c3_43 = arith.constant 3 : index
    %c3_44 = arith.constant 3 : index
    %111 = memref.load %arg1[%c3_43, %c3_44] : memref<4x6xf32, #tpu.memory_space<smem>>
    %112 = vector.broadcast %111 : f32 to vector<1x128xf32>
    %113 = arith.mulf %4, %112 : vector<1x128xf32>
    %114 = arith.addf %110, %113 : vector<1x128xf32>
    %c3_45 = arith.constant 3 : index
    %c4_46 = arith.constant 4 : index
    %115 = memref.load %arg1[%c3_45, %c4_46] : memref<4x6xf32, #tpu.memory_space<smem>>
    %116 = vector.broadcast %115 : f32 to vector<1x128xf32>
    %117 = arith.mulf %5, %116 : vector<1x128xf32>
    %118 = arith.addf %114, %117 : vector<1x128xf32>
    %c3_47 = arith.constant 3 : index
    %c5_48 = arith.constant 5 : index
    %119 = memref.load %arg1[%c3_47, %c5_48] : memref<4x6xf32, #tpu.memory_space<smem>>
    %120 = vector.broadcast %119 : f32 to vector<1x128xf32>
    %121 = arith.mulf %6, %120 : vector<1x128xf32>
    %122 = arith.addf %118, %121 : vector<1x128xf32>
    %c3_49 = arith.constant 3 : index
    %123 = memref.load %arg2[%c3_49] : memref<4xf32, #tpu.memory_space<smem>>
    %124 = vector.broadcast %123 : f32 to vector<1x128xf32>
    %125 = arith.addf %122, %124 : vector<1x128xf32>
    %126 = arith.negf %125 : vector<1x128xf32>
    %127 = math.exp %126 : vector<1x128xf32>
    %cst_50 = arith.constant 1.000000e+00 : f32
    %128 = vector.broadcast %cst_50 : f32 to vector<1x128xf32>
    %129 = arith.addf %128, %127 : vector<1x128xf32>
    %130 = arith.divf %128, %129 : vector<1x128xf32>
    %c0_51 = arith.constant 0 : index
    %c0_52 = arith.constant 0 : index
    %131 = memref.load %arg3[%c0_51, %c0_52] : memref<2x4xf32, #tpu.memory_space<smem>>
    %132 = vector.broadcast %131 : f32 to vector<1x128xf32>
    %133 = arith.mulf %37, %132 : vector<1x128xf32>
    %c0_53 = arith.constant 0 : index
    %c1_54 = arith.constant 1 : index
    %134 = memref.load %arg3[%c0_53, %c1_54] : memref<2x4xf32, #tpu.memory_space<smem>>
    %135 = vector.broadcast %134 : f32 to vector<1x128xf32>
    %136 = arith.mulf %68, %135 : vector<1x128xf32>
    %137 = arith.addf %133, %136 : vector<1x128xf32>
    %c0_55 = arith.constant 0 : index
    %c2_56 = arith.constant 2 : index
    %138 = memref.load %arg3[%c0_55, %c2_56] : memref<2x4xf32, #tpu.memory_space<smem>>
    %139 = vector.broadcast %138 : f32 to vector<1x128xf32>
    %140 = arith.mulf %99, %139 : vector<1x128xf32>
    %141 = arith.addf %137, %140 : vector<1x128xf32>
    %c0_57 = arith.constant 0 : index
    %c3_58 = arith.constant 3 : index
    %142 = memref.load %arg3[%c0_57, %c3_58] : memref<2x4xf32, #tpu.memory_space<smem>>
    %143 = vector.broadcast %142 : f32 to vector<1x128xf32>
    %144 = arith.mulf %130, %143 : vector<1x128xf32>
    %145 = arith.addf %141, %144 : vector<1x128xf32>
    %c0_59 = arith.constant 0 : index
    %146 = memref.load %arg4[%c0_59] : memref<2xf32, #tpu.memory_space<smem>>
    %147 = vector.broadcast %146 : f32 to vector<1x128xf32>
    %148 = arith.addf %145, %147 : vector<1x128xf32>
    %149 = arith.negf %148 : vector<1x128xf32>
    %150 = math.exp %149 : vector<1x128xf32>
    %cst_60 = arith.constant 1.000000e+00 : f32
    %151 = vector.broadcast %cst_60 : f32 to vector<1x128xf32>
    %152 = arith.addf %151, %150 : vector<1x128xf32>
    %153 = arith.divf %151, %152 : vector<1x128xf32>
    %c1_61 = arith.constant 1 : index
    %c0_62 = arith.constant 0 : index
    %154 = memref.load %arg3[%c1_61, %c0_62] : memref<2x4xf32, #tpu.memory_space<smem>>
    %155 = vector.broadcast %154 : f32 to vector<1x128xf32>
    %156 = arith.mulf %37, %155 : vector<1x128xf32>
    %c1_63 = arith.constant 1 : index
    %c1_64 = arith.constant 1 : index
    %157 = memref.load %arg3[%c1_63, %c1_64] : memref<2x4xf32, #tpu.memory_space<smem>>
    %158 = vector.broadcast %157 : f32 to vector<1x128xf32>
    %159 = arith.mulf %68, %158 : vector<1x128xf32>
    %160 = arith.addf %156, %159 : vector<1x128xf32>
    %c1_65 = arith.constant 1 : index
    %c2_66 = arith.constant 2 : index
    %161 = memref.load %arg3[%c1_65, %c2_66] : memref<2x4xf32, #tpu.memory_space<smem>>
    %162 = vector.broadcast %161 : f32 to vector<1x128xf32>
    %163 = arith.mulf %99, %162 : vector<1x128xf32>
    %164 = arith.addf %160, %163 : vector<1x128xf32>
    %c1_67 = arith.constant 1 : index
    %c3_68 = arith.constant 3 : index
    %165 = memref.load %arg3[%c1_67, %c3_68] : memref<2x4xf32, #tpu.memory_space<smem>>
    %166 = vector.broadcast %165 : f32 to vector<1x128xf32>
    %167 = arith.mulf %130, %166 : vector<1x128xf32>
    %168 = arith.addf %164, %167 : vector<1x128xf32>
    %c1_69 = arith.constant 1 : index
    %169 = memref.load %arg4[%c1_69] : memref<2xf32, #tpu.memory_space<smem>>
    %170 = vector.broadcast %169 : f32 to vector<1x128xf32>
    %171 = arith.addf %168, %170 : vector<1x128xf32>
    %172 = arith.negf %171 : vector<1x128xf32>
    %173 = math.exp %172 : vector<1x128xf32>
    %cst_70 = arith.constant 1.000000e+00 : f32
    %174 = vector.broadcast %cst_70 : f32 to vector<1x128xf32>
    %175 = arith.addf %174, %173 : vector<1x128xf32>
    %176 = arith.divf %174, %175 : vector<1x128xf32>
    %c0_71 = arith.constant 0 : index
    %c0_72 = arith.constant 0 : index
    %177 = memref.load %arg5[%c0_71, %c0_72] : memref<1x2xf32, #tpu.memory_space<smem>>
    %178 = vector.broadcast %177 : f32 to vector<1x128xf32>
    %179 = arith.mulf %153, %178 : vector<1x128xf32>
    %c0_73 = arith.constant 0 : index
    %c1_74 = arith.constant 1 : index
    %180 = memref.load %arg5[%c0_73, %c1_74] : memref<1x2xf32, #tpu.memory_space<smem>>
    %181 = vector.broadcast %180 : f32 to vector<1x128xf32>
    %182 = arith.mulf %176, %181 : vector<1x128xf32>
    %183 = arith.addf %179, %182 : vector<1x128xf32>
    %c0_75 = arith.constant 0 : index
    %184 = memref.load %arg6[%c0_75] : memref<1xf32, #tpu.memory_space<smem>>
    %185 = vector.broadcast %184 : f32 to vector<1x128xf32>
    %186 = arith.addf %183, %185 : vector<1x128xf32>
    %c0_76 = arith.constant 0 : index
    %c0_77 = arith.constant 0 : index
    %187 = vector.load %arg8[%c0_76, %c0_77] : memref<1x128xf32, #tpu.memory_space<vmem>>, vector<1x128xf32>
    tpu.vector_store %arg8[%c0_76, %c0_77], %186 {strides = array<i32>} : memref<1x128xf32, #tpu.memory_space<vmem>>, vector<1x128xf32>,
    return
  }
  func.func @transform_0(%arg0: i32) -> (i32, i32) {
    %c0_i32 = arith.constant 0 : i32
    %c0_i32_0 = arith.constant 0 : i32
    %c0_i32_1 = arith.constant 0 : i32
    return %c0_i32, %c0_i32_0 : i32, i32
  }
  func.func @transform_1(%arg0: i32) -> i32 {
    %c0_i32 = arith.constant 0 : i32
    %c0_i32_0 = arith.constant 0 : i32
    return %c0_i32 : i32
  }
  func.func @transform_2(%arg0: i32) -> (i32, i32) {
    %c0_i32 = arith.constant 0 : i32
    %c0_i32_0 = arith.constant 0 : i32
    %c0_i32_1 = arith.constant 0 : i32
    return %c0_i32, %c0_i32_0 : i32, i32
  }
  func.func @transform_3(%arg0: i32) -> i32 {
    %c0_i32 = arith.constant 0 : i32
    %c0_i32_0 = arith.constant 0 : i32
    return %c0_i32 : i32
  }
  func.func @transform_4(%arg0: i32) -> (i32, i32) {
    %c0_i32 = arith.constant 0 : i32
    %c0_i32_0 = arith.constant 0 : i32
    %c0_i32_1 = arith.constant 0 : i32
    return %c0_i32, %c0_i32_0 : i32, i32
  }
  func.func @transform_5(%arg0: i32) -> i32 {
    %c0_i32 = arith.constant 0 : i32
    %c0_i32_0 = arith.constant 0 : i32
    return %c0_i32 : i32
  }
  func.func @transform_6(%arg0: i32) -> (i32, i32) {
    %c0_i32 = arith.constant 0 : i32
    %c0_i32_0 = arith.constant 0 : i32
    return %c0_i32, %arg0 : i32, i32
  }
  func.func @transform_7(%arg0: i32) -> (i32, i32) {
    %c0_i32 = arith.constant 0 : i32
    %c0_i32_0 = arith.constant 0 : i32
    return %c0_i32, %arg0 : i32, i32
  }
}

</mosaic_0001>

<llo_original>
// kernel: tpu_custom_call.1
$region0: #{tpu_custom_call.1}
  #allocation0 [shape = 'u32[]', space=smem, size = 0x4, offset = 0x4, fixed_abs, tag = 'smem constant byte address 0x4 - core index']
  #allocation1 [shape = 'u32[144,128]{1,0:T(1,128)}', space=vmem, size = 0x12000, scoped, tag = 'internal scratch']
  #allocation2 [shape = 'f32[1]{0:T(128)S(6)}', space=smem, size = 0x200, scoped, tag = 'scoped memory for tpu_custom_call.1']
  %s0 = inlined_call_operand.hbm [shape: f32[4,6], index: 0, kind: input, shape index: {}]
  %s1 = inlined_call_operand.vmem [shape: f32[4], index: 1, kind: input, shape index: {}]
  %s2 = inlined_call_operand.vmem [shape: f32[2,4], index: 2, kind: input, shape index: {}]
  %s3 = inlined_call_operand.vmem [shape: f32[2], index: 3, kind: input, shape index: {}]
  %s4 = inlined_call_operand.vmem [shape: f32[1,2], index: 4, kind: input, shape index: {}]
  %s5 = inlined_call_operand.<no memory space> [shape: f32[1], index: 5, kind: input, shape index: {}]
  %s6 = inlined_call_operand.vmem [shape: f32[6,128], index: 6, kind: input, shape index: {}]
  %s7 = inlined_call_operand.hbm [shape: f32[1,128], index: 7, kind: output, shape index: {}]
  %s8 = sld [smem:[#allocation0]]
  $region58: #{tpu_custom_call.1} parent=0
    _
  %s10 = ssub.s32 1, %s8
  %s11 = scalar_select 0, %s10, %s8
  %12 = sst [smem:[#allocation2]] %s5
  $region1: #{tpu_custom_call.1} parent=0
    #allocation3 [shape = 'u8[2048]{0}', space=smem, size = 0x800, scoped, tag = 'input window, operand 0, single buffered']
    #allocation4 [shape = 's32[1]{0}', space=sflag, size = 0x4, scoped, tag = 'scoped memory for tpu_custom_call.1']
    #allocation5 [shape = 's32[1]{0}', space=sflag, size = 0x4, scoped, tag = 'scoped memory for tpu_custom_call.1']
    #allocation6 [shape = 's32[1]{0}', space=sflag, size = 0x4, scoped, tag = 'scoped memory for tpu_custom_call.1']
    #allocation7 [shape = 'u8[512]{0}', space=smem, size = 0x200, scoped, tag = 'input window, operand 1, single buffered']
    #allocation8 [shape = 'u8[1024]{0}', space=smem, size = 0x400, scoped, tag = 'input window, operand 2, single buffered']
    #allocation9 [shape = 's32[1]{0}', space=sflag, size = 0x4, scoped, tag = 'scoped memory for tpu_custom_call.1']
    #allocation10 [shape = 'u8[512]{0}', space=smem, size = 0x200, scoped, tag = 'input window, operand 3, single buffered']
    #allocation11 [shape = 'u8[512]{0}', space=smem, size = 0x200, scoped, tag = 'input window, operand 4, single buffered']
    #allocation12 [shape = 's32[1]{0}', space=sflag, size = 0x4, scoped, tag = 'scoped memory for tpu_custom_call.1']
    #allocation13 [shape = 'u8[512]{0}', space=vmem, size = 0x400, scoped, tag = 'output window, operand 0, single buffered']
    %13 = vsyncpa [#allocation5], 0
    %14 = vsyncpa [#allocation6], 0
    %15 = vsyncpa [#allocation9], 0
    %16 = vsyncpa [#allocation12], 0
    %17 = vsyncpa [#allocation4], 0
    // Predicated region
    $region2: #{tpu_custom_call.1} parent=1 // pred_check
      _
    $region3: #{tpu_custom_call.1} parent=1 // pred_check_branch
      %19 = sbr.rel (0) target = $region5
    $region4: #{tpu_custom_call.1} parent=1 // pred_region
      %s21 = ssub.s32 64, 64
      %22 = vsyncadd [#allocation5], %s21
      %25 = dma.hbm_to_smem %s0, 64, [#allocation3], [#allocation5]
    $region5: #{tpu_custom_call.1} parent=1 // pred_fallthru
      _
    // Predicated region
    $region6: #{tpu_custom_call.1} parent=1 // pred_check
      _
    $region7: #{tpu_custom_call.1} parent=1 // pred_check_branch
      %27 = sbr.rel (0) target = $region9
    $region8: #{tpu_custom_call.1} parent=1 // pred_region
      %s29 = ssub.s32 16, 16
      %30 = vsyncadd [#allocation6], %s29
      %s32 = sshll.u32 %s1, 4
      %s33 = int_to_ptr.vmem [resolvable:$true] %s32
      %35 = dma.vmem_to_smem %s33, 16, [#allocation7], [#allocation6]
    $region9: #{tpu_custom_call.1} parent=1 // pred_fallthru
      _
    // Predicated region
    $region10: #{tpu_custom_call.1} parent=1 // pred_check
      _
    $region11: #{tpu_custom_call.1} parent=1 // pred_check_branch
      %37 = sbr.rel (0) target = $region13
    $region12: #{tpu_custom_call.1} parent=1 // pred_region
      %s39 = ssub.s32 32, 32
      %40 = vsyncadd [#allocation9], %s39
      %s42 = sshll.u32 %s2, 4
      %s43 = int_to_ptr.vmem [resolvable:$true] %s42
      %45 = dma.vmem_to_smem %s43, 32, [#allocation8], [#allocation9]
    $region13: #{tpu_custom_call.1} parent=1 // pred_fallthru
      _
    // Predicated region
    $region14: #{tpu_custom_call.1} parent=1 // pred_check
      _
    $region15: #{tpu_custom_call.1} parent=1 // pred_check_branch
      %47 = sbr.rel (0) target = $region17
    $region16: #{tpu_custom_call.1} parent=1 // pred_region
      %s49 = ssub.s32 16, 16
      %50 = vsyncadd [#allocation9], %s49
      %s52 = sshll.u32 %s3, 4
      %s53 = int_to_ptr.vmem [resolvable:$true] %s52
      %55 = dma.vmem_to_smem %s53, 16, [#allocation10], [#allocation9]
    $region17: #{tpu_custom_call.1} parent=1 // pred_fallthru
      _
    // Predicated region
    $region18: #{tpu_custom_call.1} parent=1 // pred_check
      _
    $region19: #{tpu_custom_call.1} parent=1 // pred_check_branch
      %57 = sbr.rel (0) target = $region21
    $region20: #{tpu_custom_call.1} parent=1 // pred_region
      %s59 = ssub.s32 16, 16
      %60 = vsyncadd [#allocation12], %s59
      %s62 = sshll.u32 %s4, 4
      %s63 = int_to_ptr.vmem [resolvable:$true] %s62
      %65 = dma.vmem_to_smem %s63, 16, [#allocation11], [#allocation12]
    $region21: #{tpu_custom_call.1} parent=1 // pred_fallthru
      _
    // Predicated region
    $region22: #{tpu_custom_call.1} parent=1 // pred_check
      _
    $region23: #{tpu_custom_call.1} parent=1 // pred_check_branch
      %67 = sbr.rel (0) target = $region25
    $region24: #{tpu_custom_call.1} parent=1 // pred_region
      _
    $region25: #{tpu_custom_call.1} parent=1 // pred_fallthru
      _
    // Predicated region
    $region26: #{tpu_custom_call.1} parent=1 // pred_check
      _
    $region27: #{tpu_custom_call.1} parent=1 // pred_check_branch
      %69 = sbr.rel (0) target = $region29
    $region28: #{tpu_custom_call.1} parent=1 // pred_region
      _
    $region29: #{tpu_custom_call.1} parent=1 // pred_fallthru
      _
    // Predicated region
    $region30: #{tpu_custom_call.1} parent=1 // pred_check
      _
    $region31: #{tpu_custom_call.1} parent=1 // pred_check_branch
      %71 = sbr.rel (0) target = $region33
    $region32: #{tpu_custom_call.1} parent=1 // pred_region
      %72 = dma.done [#allocation5], 64
    $region33: #{tpu_custom_call.1} parent=1 // pred_fallthru
      _
    // Predicated region
    $region34: #{tpu_custom_call.1} parent=1 // pred_check
      _
    $region35: #{tpu_custom_call.1} parent=1 // pred_check_branch
      %74 = sbr.rel (0) target = $region37
    $region36: #{tpu_custom_call.1} parent=1 // pred_region
      %75 = dma.done [#allocation6], 16
    $region37: #{tpu_custom_call.1} parent=1 // pred_fallthru
      _
    // Predicated region
    $region38: #{tpu_custom_call.1} parent=1 // pred_check
      _
    $region39: #{tpu_custom_call.1} parent=1 // pred_check_branch
      %77 = sbr.rel (0) target = $region41
    $region40: #{tpu_custom_call.1} parent=1 // pred_region
      %78 = dma.done [#allocation9], 32
    $region41: #{tpu_custom_call.1} parent=1 // pred_fallthru
      _
    // Predicated region
    $region42: #{tpu_custom_call.1} parent=1 // pred_check
      _
    $region43: #{tpu_custom_call.1} parent=1 // pred_check_branch
      %80 = sbr.rel (0) target = $region45
    $region44: #{tpu_custom_call.1} parent=1 // pred_region
      %81 = dma.done [#allocation9], 16
    $region45: #{tpu_custom_call.1} parent=1 // pred_fallthru
      _
    // Predicated region
    $region46: #{tpu_custom_call.1} parent=1 // pred_check
      _
    $region47: #{tpu_custom_call.1} parent=1 // pred_check_branch
      %83 = sbr.rel (0) target = $region49
    $region48: #{tpu_custom_call.1} parent=1 // pred_region
      %84 = dma.done [#allocation12], 16
    $region49: #{tpu_custom_call.1} parent=1 // pred_fallthru
      _
    %85 = sfence
    %v86 = vld [vmem:[%s6] sm:$0x3f]
    %s87 = sld [smem:[#allocation3]]
    %v88 = vstv %s87
    %v89 = vmul.f32 %v86, %v88
    %s90 = sld [smem:[#allocation3 + $0x1]]
    %v91 = vstv %s90
    %v92 = vmul.f32 %v86, %v91
    %v94 = vrot.slane %v92, 1
    %v96 = vadd.f32 %v89, %v94
    %s97 = sld [smem:[#allocation3 + $0x2]]
    %v98 = vstv %s97
    %v99 = vmul.f32 %v86, %v98
    %v101 = vrot.slane %v99, 2
    %v103 = vadd.f32 %v96, %v101
    %s104 = sld [smem:[#allocation3 + $0x3]]
    %v105 = vstv %s104
    %v106 = vmul.f32 %v86, %v105
    %v108 = vrot.slane %v106, 3
    %v110 = vadd.f32 %v103, %v108
    %s111 = sld [smem:[#allocation3 + $0x4]]
    %v112 = vstv %s111
    %v113 = vmul.f32 %v86, %v112
    %v115 = vrot.slane %v113, 4
    %v117 = vadd.f32 %v110, %v115
    %s118 = sld [smem:[#allocation3 + $0x5]]
    %v119 = vstv %s118
    %v120 = vmul.f32 %v86, %v119
    %v122 = vrot.slane %v120, 5
    %v124 = vadd.f32 %v117, %v122
    %s125 = sld [smem:[#allocation7]]
    %v126 = vstv %s125
    %v127 = vadd.f32 %v124, %v126
    %v128 = vxor.u32 %v127, 2147483648
    %v129 = vmul.f32 %v128, 1.442695
    %v130 = vpow.pop %v129
    %v131 = vadd.f32 %v130, 1.0
    %v132 = vrcp.pop %v131
    %v133 = vmul.f32 1.0, %v132
    %s134 = sld [smem:[#allocation3 + $0x80]]
    %v135 = vstv %s134
    %v136 = vmul.f32 %v86, %v135
    %s137 = sld [smem:[#allocation3 + $0x81]]
    %v138 = vstv %s137
    %v139 = vmul.f32 %v86, %v138
    %v141 = vrot.slane %v139, 1
    %v143 = vadd.f32 %v136, %v141
    %s144 = sld [smem:[#allocation3 + $0x82]]
    %v145 = vstv %s144
    %v146 = vmul.f32 %v86, %v145
    %v148 = vrot.slane %v146, 2
    %v150 = vadd.f32 %v143, %v148
    %s151 = sld [smem:[#allocation3 + $0x83]]
    %v152 = vstv %s151
    %v153 = vmul.f32 %v86, %v152
    %v155 = vrot.slane %v153, 3
    %v157 = vadd.f32 %v150, %v155
    %s158 = sld [smem:[#allocation3 + $0x84]]
    %v159 = vstv %s158
    %v160 = vmul.f32 %v86, %v159
    %v162 = vrot.slane %v160, 4
    %v164 = vadd.f32 %v157, %v162
    %s165 = sld [smem:[#allocation3 + $0x85]]
    %v166 = vstv %s165
    %v167 = vmul.f32 %v86, %v166
    %v169 = vrot.slane %v167, 5
    %v171 = vadd.f32 %v164, %v169
    %s172 = sld [smem:[#allocation7 + $0x1]]
    %v173 = vstv %s172
    %v174 = vadd.f32 %v171, %v173
    %v175 = vxor.u32 %v174, 2147483648
    %v176 = vmul.f32 %v175, 1.442695
    %v177 = vpow.pop %v176
    %v178 = vadd.f32 %v177, 1.0
    %v179 = vrcp.pop %v178
    %v180 = vmul.f32 1.0, %v179
    %s181 = sld [smem:[#allocation3 + $0x100]]
    %v182 = vstv %s181
    %v183 = vmul.f32 %v86, %v182
    %s184 = sld [smem:[#allocation3 + $0x101]]
    %v185 = vstv %s184
    %v186 = vmul.f32 %v86, %v185
    %v188 = vrot.slane %v186, 1
    %v190 = vadd.f32 %v183, %v188
    %s191 = sld [smem:[#allocation3 + $0x102]]
    %v192 = vstv %s191
    %v193 = vmul.f32 %v86, %v192
    %v195 = vrot.slane %v193, 2
    %v197 = vadd.f32 %v190, %v195
    %s198 = sld [smem:[#allocation3 + $0x103]]
    %v199 = vstv %s198
    %v200 = vmul.f32 %v86, %v199
    %v202 = vrot.slane %v200, 3
    %v204 = vadd.f32 %v197, %v202
    %s205 = sld [smem:[#allocation3 + $0x104]]
    %v206 = vstv %s205
    %v207 = vmul.f32 %v86, %v206
    %v209 = vrot.slane %v207, 4
    %v211 = vadd.f32 %v204, %v209
    %s212 = sld [smem:[#allocation3 + $0x105]]
    %v213 = vstv %s212
    %v214 = vmul.f32 %v86, %v213
    %v216 = vrot.slane %v214, 5
    %v218 = vadd.f32 %v211, %v216
    %s219 = sld [smem:[#allocation7 + $0x2]]
    %v220 = vstv %s219
    %v221 = vadd.f32 %v218, %v220
    %v222 = vxor.u32 %v221, 2147483648
    %v223 = vmul.f32 %v222, 1.442695
    %v224 = vpow.pop %v223
    %v225 = vadd.f32 %v224, 1.0
    %v226 = vrcp.pop %v225
    %v227 = vmul.f32 1.0, %v226
    %s228 = sld [smem:[#allocation3 + $0x180]]
    %v229 = vstv %s228
    %v230 = vmul.f32 %v86, %v229
    %s231 = sld [smem:[#allocation3 + $0x181]]
    %v232 = vstv %s231
    %v233 = vmul.f32 %v86, %v232
    %v235 = vrot.slane %v233, 1
    %v237 = vadd.f32 %v230, %v235
    %s238 = sld [smem:[#allocation3 + $0x182]]
    %v239 = vstv %s238
    %v240 = vmul.f32 %v86, %v239
    %v242 = vrot.slane %v240, 2
    %v244 = vadd.f32 %v237, %v242
    %s245 = sld [smem:[#allocation3 + $0x183]]
    %v246 = vstv %s245
    %v247 = vmul.f32 %v86, %v246
    %v249 = vrot.slane %v247, 3
    %v251 = vadd.f32 %v244, %v249
    %s252 = sld [smem:[#allocation3 + $0x184]]
    %v253 = vstv %s252
    %v254 = vmul.f32 %v86, %v253
    %v256 = vrot.slane %v254, 4
    %v258 = vadd.f32 %v251, %v256
    %s259 = sld [smem:[#allocation3 + $0x185]]
    %v260 = vstv %s259
    %v261 = vmul.f32 %v86, %v260
    %v263 = vrot.slane %v261, 5
    %v265 = vadd.f32 %v258, %v263
    %s266 = sld [smem:[#allocation7 + $0x3]]
    %v267 = vstv %s266
    %v268 = vadd.f32 %v265, %v267
    %v269 = vxor.u32 %v268, 2147483648
    %v270 = vmul.f32 %v269, 1.442695
    %v271 = vpow.pop %v270
    %v272 = vadd.f32 %v271, 1.0
    %v273 = vrcp.pop %v272
    %v274 = vmul.f32 1.0, %v273
    %s275 = sld [smem:[#allocation8]]
    %v276 = vstv %s275
    %v277 = vmul.f32 %v133, %v276
    %s278 = sld [smem:[#allocation8 + $0x1]]
    %v279 = vstv %s278
    %v280 = vmul.f32 %v180, %v279
    %v281 = vadd.f32 %v277, %v280
    %s282 = sld [smem:[#allocation8 + $0x2]]
    %v283 = vstv %s282
    %v284 = vmul.f32 %v227, %v283
    %v285 = vadd.f32 %v281, %v284
    %s286 = sld [smem:[#allocation8 + $0x3]]
    %v287 = vstv %s286
    %v288 = vmul.f32 %v274, %v287
    %v289 = vadd.f32 %v285, %v288
    %s290 = sld [smem:[#allocation10]]
    %v291 = vstv %s290
    %v292 = vadd.f32 %v289, %v291
    %v293 = vxor.u32 %v292, 2147483648
    %v294 = vmul.f32 %v293, 1.442695
    %v295 = vpow.pop %v294
    %v296 = vadd.f32 %v295, 1.0
    %v297 = vrcp.pop %v296
    %v298 = vmul.f32 1.0, %v297
    %s299 = sld [smem:[#allocation8 + $0x80]]
    %v300 = vstv %s299
    %v301 = vmul.f32 %v133, %v300
    %s302 = sld [smem:[#allocation8 + $0x81]]
    %v303 = vstv %s302
    %v304 = vmul.f32 %v180, %v303
    %v305 = vadd.f32 %v301, %v304
    %s306 = sld [smem:[#allocation8 + $0x82]]
    %v307 = vstv %s306
    %v308 = vmul.f32 %v227, %v307
    %v309 = vadd.f32 %v305, %v308
    %s310 = sld [smem:[#allocation8 + $0x83]]
    %v311 = vstv %s310
    %v312 = vmul.f32 %v274, %v311
    %v313 = vadd.f32 %v309, %v312
    %s314 = sld [smem:[#allocation10 + $0x1]]
    %v315 = vstv %s314
    %v316 = vadd.f32 %v313, %v315
    %v317 = vxor.u32 %v316, 2147483648
    %v318 = vmul.f32 %v317, 1.442695
    %v319 = vpow.pop %v318
    %v320 = vadd.f32 %v319, 1.0
    %v321 = vrcp.pop %v320
    %v322 = vmul.f32 1.0, %v321
    %s323 = sld [smem:[#allocation11]]
    %v324 = vstv %s323
    %v325 = vmul.f32 %v298, %v324
    %s326 = sld [smem:[#allocation11 + $0x1]]
    %v327 = vstv %s326
    %v328 = vmul.f32 %v322, %v327
    %v329 = vadd.f32 %v325, %v328
    %s330 = sld [smem:[#allocation2]]
    %v331 = vstv %s330
    %v332 = vadd.f32 %v329, %v331
    %333 = vst [vmem:[#allocation13] sm:$0x1] %v332
    // Predicated region
    $region50: #{tpu_custom_call.1} parent=1 // pred_check
      _
    $region51: #{tpu_custom_call.1} parent=1 // pred_check_branch
      %335 = sbr.rel (0) target = $region53
    $region52: #{tpu_custom_call.1} parent=1 // pred_region
      %s337 = ssub.s32 16, 16
      %338 = vsyncadd [#allocation4], %s337
      %s340 = sshll.u32 [#allocation13], 4
      %s341 = int_to_ptr.vmem [resolvable:$true] %s340
      %343 = dma.vmem_to_hbm [thread:$0]  %s341, 16, %s7, [#allocation4]
    $region53: #{tpu_custom_call.1} parent=1 // pred_fallthru
      _
    // Predicated region
    $region54: #{tpu_custom_call.1} parent=1 // pred_check
      _
    $region55: #{tpu_custom_call.1} parent=1 // pred_check_branch
      %345 = sbr.rel (0) target = $region57
    $region56: #{tpu_custom_call.1} parent=1 // pred_region
      %346 = dma.done [#allocation4], 16
    $region57: #{tpu_custom_call.1} parent=1 // pred_fallthru
      _
    %347 = vsyncpa [#allocation4], 1
    %348 = vsyncpa [#allocation5], 1
    %349 = vsyncpa [#allocation6], 1
    %350 = vsyncpa [#allocation9], 1
    %351 = vsyncpa [#allocation12], 1

</llo_original>
